<compile_context>
chip_gen: v7x
topology: tpu7x:2x2x1
jax: 0.10.0
libtpu: 0.0.40
codegen_flags: <defaults>
</compile_context>

<pallas_src>
import functools

import jax
import jax.numpy as jnp
from jax.experimental import pallas as pl
from jax.experimental.pallas import tpu as pltpu


def _vmem_budgets():
    """(per-step tile budget, scoped vmem_limit_bytes) derived from real VMEM size."""
    cap = 64 * 1024 * 1024  # conservative default = v7x per-TC VMEM
    try:
        cap = int(pltpu.get_tpu_info().vmem_capacity_bytes)
    except Exception:
        pass
    if cap <= 80 * 1024 * 1024:
        # v7x-class (64 MiB/TC): leave headroom for Mosaic scratch + fusions.
        vmem_limit = (cap * 3) // 5          # ~38 MiB
    else:
        # v5e / v6e (128 MiB): default scoped limit (16/32 MiB) is far too small.
        vmem_limit = (cap * 4) // 5          # ~102 MiB
    return vmem_limit // 2, vmem_limit


def _largest_divisor_leq(n, cap):
    cap = max(1, min(int(cap), int(n)))
    for r in range(cap, 0, -1):
        if n % r == 0:
            return r
    return 1


def _choose_tile_rows(n_rows, row_bytes, budget):
    """Rows per tile: the full dim if it fits, else a large multiple of 8 (cdiv grid)."""
    t = max(1, int(budget) // max(1, int(row_bytes)))
    if t >= n_rows:
        return n_rows
    # TODO(synk): a single row wider than the budget (absurd d_model) still soft-overflows.
    return min(max(8, (t // 8) * 8), n_rows)


# ----------------------------- fused single-pass path -----------------------------

def _rmsnorm_fused_kernel(x_ref, scale_ref, o_ref):
    # x_ref / o_ref: (Bt, M, C); scale_ref: (M, C)
    xf = x_ref[...].astype(jnp.float32)                       # f32 accumulation & math
    n = xf.shape[1] * xf.shape[2]
    ssq = jnp.sum(xf * xf, axis=(1, 2), keepdims=True)        # (Bt, 1, 1)
    inv = jax.lax.rsqrt(ssq * (1.0 / float(n)))                # 1/sqrt(mean(x^2)), EUP
    sf = scale_ref[...].astype(jnp.float32)[None, :, :]
    o_ref[...] = (xf * inv * sf).astype(o_ref.dtype)           # single cast at store


def _rmsnorm_fused(x, scale, tile_budget, vmem_limit):
    B, M, C = x.shape
    fused_bpe = 4 * x.dtype.itemsize + 8                      # 2x in + 2x out + f32 temps
    avail = max(1, tile_budget - 2 * M * C * scale.dtype.itemsize)
    max_bt = max(1, avail // max(1, M * C * fused_bpe))
    if B >= 2:
        max_bt = min(max_bt, max(1, B // 2))                   # keep >=2 steps (megacore)
    Bt = _largest_divisor_leq(B, max_bt)
    return pl.pallas_call(
        _rmsnorm_fused_kernel,
        out_shape=jax.ShapeDtypeStruct((B, M, C), x.dtype),
        grid_spec=pl.GridSpec(
            grid=(B // Bt,),
            in_specs=[
                pl.BlockSpec((Bt, M, C), lambda b: (b, 0, 0)),
                # Constant index_map -> fetched once across the whole grid.
                pl.BlockSpec((M, C), lambda b: (0, 0)),
            ],
            out_specs=pl.BlockSpec((Bt, M, C), lambda b: (b, 0, 0)),
        ),
        compiler_params=pltpu.CompilerParams(
            dimension_semantics=("parallel",),
            vmem_limit_bytes=int(vmem_limit),
        ),
    )(x, scale)


# ------------------------------ two-pass tiled path -------------------------------

def _ssq_kernel(n_rows, has_tail, x_ref, ssq_ref):
    # grid = (B, n_s); the row-tile reduction axis is last and marked "arbitrary".
    # ssq_ref block index is constant across it -> resident accumulator.
    si = pl.program_id(1)

    @pl.when(si == 0)
    def _():
        ssq_ref[...] = jnp.zeros_like(ssq_ref)

    xf = x_ref[...].astype(jnp.float32)                        # f32 accumulation
    sq = xf * xf
    if has_tail:
        # cdiv grid: mask out-of-bounds rows of the last tile (their content is garbage).
        ts = x_ref.shape[1]
        row = jax.lax.broadcasted_iota(jnp.int32, sq.shape, 1)
        sq = jnp.where(row < (n_rows - si * ts), sq, 0.0)
    ssq_ref[...] = ssq_ref[...] + jnp.sum(sq)                  # scalar broadcast add


def _scale_kernel(inv_ref, x_ref, scale_ref, o_ref):
    # inv_ref: (B,) f32 in SMEM (scalar prefetch); grid = (n_s, B), batch innermost.
    b = pl.program_id(1)
    xf = x_ref[...].astype(jnp.float32)                        # (1, Ts, C)
    sf = scale_ref[...].astype(jnp.float32)[None, :, :]        # (1, Ts, C)
    o_ref[...] = (xf * inv_ref[b] * sf).astype(o_ref.dtype)    # single cast at store


def _rmsnorm_two_pass(x, scale, tile_budget, vmem_limit):
    B, M, C = x.shape
    x_it = x.dtype.itemsize
    s_it = scale.dtype.itemsize

    # ---- Pass 1: per-batch sum of squares (input double-buffered only + f32 temps).
    bpe1 = 2 * x_it + 8
    Ts1 = _choose_tile_rows(M, C * bpe1, tile_budget)
    ns1 = pl.cdiv(M, Ts1)
    ssq = pl.pallas_call(
        functools.partial(_ssq_kernel, M, (M % Ts1) != 0),
        out_shape=jax.ShapeDtypeStruct((B, 1, 128), jnp.float32),
        grid_spec=pl.GridSpec(
            grid=(B, ns1),
            in_specs=[pl.BlockSpec((1, Ts1, C), lambda b, si: (b, si, 0))],
            out_specs=pl.BlockSpec((1, 1, 128), lambda b, si: (b, 0, 0)),
        ),
        compiler_params=pltpu.CompilerParams(
            dimension_semantics=("parallel", "arbitrary"),
            vmem_limit_bytes=int(vmem_limit),
        ),
    )(x)

    # Tiny (B,)-sized XLA op between the passes: 1/sqrt(mean(x^2)) per batch element.
    inv = jax.lax.rsqrt(ssq[:, 0, 0] * (1.0 / float(M * C)))   # (B,) f32

    # ---- Pass 2: re-stream x, normalize and apply the scale.  Batch is the INNERMOST
    # grid axis so the (Ts2, C) scale block stays resident in VMEM instead of being
    # re-fetched from HBM for every batch element.  inv arrives via scalar prefetch.
    bpe2 = 4 * x_it + 8                                        # 2x in + 2x out + f32 temps
    Ts2 = _choose_tile_rows(M, C * bpe2 + 2 * C * s_it, tile_budget)
    ns2 = pl.cdiv(M, Ts2)
    return pl.pallas_call(
        _scale_kernel,
        out_shape=jax.ShapeDtypeStruct((B, M, C), x.dtype),
        grid_spec=pltpu.PrefetchScalarGridSpec(
            num_scalar_prefetch=1,
            grid=(ns2, B),
            in_specs=[
                pl.BlockSpec((1, Ts2, C), lambda si, b, inv: (b, si, 0)),
                pl.BlockSpec((Ts2, C), lambda si, b, inv: (si, 0)),
            ],
            out_specs=pl.BlockSpec((1, Ts2, C), lambda si, b, inv: (b, si, 0)),
        ),
        compiler_params=pltpu.CompilerParams(
            dimension_semantics=("parallel", "parallel"),
            vmem_limit_bytes=int(vmem_limit),
        ),
    )(inv, x, scale)


# ----------------------------------- wrapper ---------------------------------------

def rmsnorm_pallas(x, scale, *, tile_budget_bytes=None, vmem_limit_bytes=None):
    """x: (B, S, D); scale: (S_full, D) with S_full >= S. Returns (B, S, D).

    Mirrors the PyTorch module: per-batch Frobenius-norm RMS over (seq, d_model),
    scale sliced to the first S rows (self.scale[:x.shape[1], :]) and broadcast over
    batch.  No eps (registered but unused in the module's forward).
    """
    B, S, D = x.shape
    scale_used = scale[:S, :]

    tile_budget, vmem_limit = _vmem_budgets()
    if tile_budget_bytes is not None:
        tile_budget = int(tile_budget_bytes)
    if vmem_limit_bytes is not None:
        vmem_limit = int(vmem_limit_bytes)

    # Lane-dense folding for BOTH paths: fold (S, D) into 128-wide rows so stores are
    # full-lane vst.  Valid because the op is elementwise over the slab with a single
    # per-batch scalar, and scale folds identically (row-major reshape).
    fold = (D % 128 != 0) and ((S * D) % 128 == 0)
    if fold:
        M, C = (S * D) // 128, 128
        x_in = x.reshape(B, M, C)
        s_in = scale_used.reshape(M, C)
    else:
        M, C = S, D
        x_in, s_in = x, scale_used

    fused_bytes = (M * C * (4 * x.dtype.itemsize + 8)           # per-batch slab
                   + 2 * M * C * s_in.dtype.itemsize)           # double-buffered scale
    if fused_bytes <= tile_budget:
        out = _rmsnorm_fused(x_in, s_in, tile_budget, vmem_limit)
    else:
        out = _rmsnorm_two_pass(x_in, s_in, tile_budget, vmem_limit)
    return out.reshape(B, S, D) if fold else out


def rmsnorm_reference(x, scale):
    B, S, D = x.shape
    xf = x.astype(jnp.float32)
    ff_rms = jnp.sqrt(jnp.sum(xf * xf, axis=(1, 2))) * (float(S * D) ** -0.5)
    raw = xf / ff_rms[:, None, None]
    return (scale[:S, :].astype(jnp.float32)[None] * raw).astype(x.dtype)


if __name__ == "__main__":
    key = jax.random.PRNGKey(0)
    k1, k2, k3, k4 = jax.random.split(key, 4)

    # 1) Small (batch, seq_len, d_model), f32 -> fused path (D=32 < 128 lanes, but
    #    S*D = 256 folds into 128-wide rows -> lane-dense layout).
    B, S, D = 2, 8, 32
    x = jax.random.normal(k1, (B, S, D), dtype=jnp.float32)
    scale = jnp.ones((S, D), dtype=jnp.float32)   # nn.Parameter(torch.ones(layer_shape))
    out = jax.block_until_ready(rmsnorm_pallas(x, scale))
    ref = rmsnorm_reference(x, scale)
    assert out.shape == (B, S, D) and out.dtype == x.dtype
    assert jnp.allclose(out, ref, atol=1e-5, rtol=1e-5)

    # 2) Force the two-pass path with a small tile budget (shape-robust path for large
    #    S*D slabs); scale has extra rows to exercise self.scale[:x.shape[1], :].
    B2, S2, D2 = 2, 256, 256
    x2 = jax.random.normal(k2, (B2, S2, D2), dtype=jnp.float32)
    scale2 = 1.0 + 0.1 * jax.random.normal(k3, (S2 + 16, D2), dtype=jnp.float32)
    out2 = jax.block_until_ready(
        rmsnorm_pallas(x2, scale2, tile_budget_bytes=512 * 1024))
    ref2 = rmsnorm_reference(x2, scale2)
    assert out2.shape == (B2, S2, D2)
    assert jnp.allclose(out2, ref2, atol=1e-4, rtol=1e-4)

    # 3) bf16 input: f32 math with a single cast at the store.
    x3 = x.astype(jnp.bfloat16)
    out3 = jax.block_until_ready(rmsnorm_pallas(x3, scale))
    ref3 = rmsnorm_reference(x3, scale)
    assert out3.dtype == jnp.bfloat16
    assert jnp.allclose(out3.astype(jnp.float32), ref3.astype(jnp.float32),
                        atol=5e-2, rtol=5e-2)

    # 4) Awkward row count + tiny budget -> two-pass with cdiv grid, 8-row tiles and
    #    tail masking (folded rows = 15, Ts = 8 -> partial last tile on both passes).
    B4, S4, D4 = 2, 20, 96
    x4 = jax.random.normal(k4, (B4, S4, D4), dtype=jnp.float32)
    scale4 = jnp.ones((S4, D4), dtype=jnp.float32)
    out4 = jax.block_until_ready(
        rmsnorm_pallas(x4, scale4, tile_budget_bytes=8 * 1024))
    ref4 = rmsnorm_reference(x4, scale4)
    assert out4.shape == (B4, S4, D4)
    assert jnp.allclose(out4, ref4, atol=1e-4, rtol=1e-4)

    print("KERNEL_OK")
</pallas_src>

<mosaic_0001>
module attributes {stable_mosaic.version = 11 : i64} {
  func.func @_rmsnorm_fused_kernel(%arg0: i32, %arg1: memref<1x2x128xf32, #tpu.memory_space<vmem>>, %arg2: memref<2x128xf32, #tpu.memory_space<vmem>>, %arg3: memref<1x2x128xf32, #tpu.memory_space<vmem>>) attributes {dimension_semantics = [#tpu.dimension_semantics<parallel>], iteration_bounds = array<i64: 2>, scalar_prefetch = 0 : i64, scratch_operands = 0 : i64, tpu.core_type = #tpu.core_type<tc>, window_params = [{transform_indices = @transform_0, window_bounds = array<i64: 1, 2, 128>}, {pipeline_mode = #tpu.pipeline_mode<synchronous>, transform_indices = @transform_1, window_bounds = array<i64: 2, 128>}, {transform_indices = @transform_2, window_bounds = array<i64: 1, 2, 128>}]} {
    %c0 = arith.constant 0 : index
    %c0_0 = arith.constant 0 : index
    %c0_1 = arith.constant 0 : index
    %0 = vector.load %arg1[%c0, %c0_0, %c0_1] : memref<1x2x128xf32, #tpu.memory_space<vmem>>, vector<1x2x128xf32>
    %1 = arith.mulf %0, %0 : vector<1x2x128xf32>
    %cst = arith.constant dense<0.000000e+00> : vector<1xf32>
    %2 = vector.multi_reduction <add>, %1, %cst [1, 2] : vector<1x2x128xf32> to vector<1xf32>
    %3 = vector.shape_cast %2 : vector<1xf32> to vector<1x1x1xf32>
    %cst_2 = arith.constant 3.906250e-03 : f32
    %4 = vector.broadcast %cst_2 : f32 to vector<1x1x1xf32>
    %5 = arith.mulf %3, %4 : vector<1x1x1xf32>
    %6 = math.rsqrt %5 : vector<1x1x1xf32>
    %c0_3 = arith.constant 0 : index
    %c0_4 = arith.constant 0 : index
    %7 = vector.load %arg2[%c0_3, %c0_4] : memref<2x128xf32, #tpu.memory_space<vmem>>, vector<2x128xf32>
    %8 = vector.shape_cast %7 : vector<2x128xf32> to vector<1x2x128xf32>
    %9 = vector.broadcast %6 : vector<1x1x1xf32> to vector<1x2x128xf32>
    %10 = arith.mulf %0, %9 : vector<1x2x128xf32>
    %11 = arith.mulf %10, %8 : vector<1x2x128xf32>
    %c0_5 = arith.constant 0 : index
    %c0_6 = arith.constant 0 : index
    %c0_7 = arith.constant 0 : index
    %12 = vector.load %arg3[%c0_5, %c0_6, %c0_7] : memref<1x2x128xf32, #tpu.memory_space<vmem>>, vector<1x2x128xf32>
    tpu.vector_store %arg3[%c0_5, %c0_6, %c0_7], %11 {strides = array<i32>} : memref<1x2x128xf32, #tpu.memory_space<vmem>>, vector<1x2x128xf32>,
    return
  }
  func.func @transform_0(%arg0: i32) -> (i32, i32, i32) {
    %c0_i32 = arith.constant 0 : i32
    %c0_i32_0 = arith.constant 0 : i32
    %c0_i32_1 = arith.constant 0 : i32
    return %arg0, %c0_i32, %c0_i32_0 : i32, i32, i32
  }
  func.func @transform_1(%arg0: i32) -> (i32, i32) {
    %c0_i32 = arith.constant 0 : i32
    %c0_i32_0 = arith.constant 0 : i32
    %c0_i32_1 = arith.constant 0 : i32
    return %c0_i32, %c0_i32_0 : i32, i32
  }
  func.func @transform_2(%arg0: i32) -> (i32, i32, i32) {
    %c0_i32 = arith.constant 0 : i32
    %c0_i32_0 = arith.constant 0 : i32
    %c0_i32_1 = arith.constant 0 : i32
    return %arg0, %c0_i32, %c0_i32_0 : i32, i32, i32
  }
}

</mosaic_0001>

<llo_original>
// kernel: tpu_custom_call.1
$region0: #{tpu_custom_call.1}
  #allocation0 [shape = 'u32[]', space=smem, size = 0x4, offset = 0x4, fixed_abs, tag = 'smem constant byte address 0x4 - core index']
  #allocation1 [shape = 'u32[144,128]{1,0:T(1,128)}', space=vmem, size = 0x12000, scoped, tag = 'internal scratch']
  %s0 = inlined_call_operand.hbm [shape: f32[2,2,128], index: 0, kind: input, shape index: {}]
  %s1 = inlined_call_operand.vmem [shape: f32[2,128], index: 1, kind: input, shape index: {}]
  %s2 = inlined_call_operand.hbm [shape: f32[2,2,128], index: 2, kind: output, shape index: {}]
  %s3 = sld [smem:[#allocation0]]
  $region45: #{tpu_custom_call.1} parent=0
    _
  %s5 = ssub.s32 1, %s3
  %s6 = scalar_select 0, %s5, %s3
  $region1: #{tpu_custom_call.1} parent=0
    #allocation2 [shape = 'u8[2048]{0}', space=vmem, size = 0x800, scoped, tag = 'input window, operand 0']
    #allocation3 [shape = 's32[2]{0}', space=sflag, size = 0x8, scoped, tag = 'scoped memory for tpu_custom_call.1']
    #allocation4 [shape = 's32[2]{0}', space=sflag, size = 0x8, scoped, tag = 'scoped memory for tpu_custom_call.1']
    #allocation5 [shape = 'u8[2048]{0}', space=vmem, size = 0x800, scoped, tag = 'output window, operand 0']
    %7 = vsyncpa [#allocation3], 0
    %s8 = scalar_lea.sflag [#allocation3], 1
    %9 = vsyncpa %s8, 0
    %10 = vsyncpa [#allocation4], 0
    %s11 = scalar_lea.sflag [#allocation4], 1
    %12 = vsyncpa %s11, 0
    loop: start=0, step=1, limit=4
    $region2: #{tpu_custom_call.1} parent=1 // loop_pre_header
      _
    $region3: #{tpu_custom_call.1} parent=1 // loop_header
      %s14 = sphi 0, %s18
      %p15 = scmp.ge.s32.totalorder %s14, 4
      %s24 = sphi 0, %s26
      %s27 = sphi 0, %s24
      %s28 = sphi 0, %s27
      %s44 = sphi 0, %s28
      %s48 = sphi 0, %s48
      %s50 = sphi 0, %s48
      %s51 = sphi 0, %s50
      %s65 = sphi 0, %s51
      %s71 = sphi 0, %s73
      %s74 = sphi 0, %s71
      %s75 = sphi 0, %s74
      %s91 = sphi 0, %s75
    $region4: #{tpu_custom_call.1} parent=1 // loop_header_branch
      %17 = sbr.rel (%p15) target = $region8
    $region5: #{tpu_custom_call.1} parent=1 // loop_body
      %s19 = ssub.s32 %s14, 1
      %s20 = ssub.s32 %s14, 2
      %s21 = sadd.s32 %s14, 1
      %s22 = ssub.s32 %s14, %s21
      %p23 = scmp.eq.s32.totalorder %s22, 0
      %s25 = sadd.s32 %s24, 1
      %s26 = scalar_select %p23, %s24, %s25
      %p29 = pneg %p23
      %p30 = scmp.eq.s32.totalorder %s14, 1
      %p31 = por %p29, %p30
      %p32 = scmp.ne.s32.totalorder %s24, %s27
      %p33 = scmp.eq.s32.totalorder %s14, 0
      %p34 = por %p32, %p33
      %p35 = scmp.ne.s32.totalorder %s24, %s27
      %p36 = scmp.eq.s32.totalorder %s19, 1
      %p37 = por %p35, %p36
      %p38 = scmp.ne.s32.totalorder %s27, %s28
      %p39 = scmp.eq.s32.totalorder %s19, 0
      %p40 = por %p38, %p39
      %p41 = scmp.ne.s32.totalorder %s27, %s28
      %p42 = scmp.eq.s32.totalorder %s20, 1
      %p43 = por %p41, %p42
      %p45 = scmp.ne.s32.totalorder %s28, %s44
      %p46 = scmp.eq.s32.totalorder %s20, 0
      %p47 = por %p45, %p46
      %s49 = sadd.s32 %s48, 1
      %p52 = scmp.eq.s32.totalorder %s14, 1
      %p53 = scmp.ne.s32.totalorder %s48, %s50
      %p54 = scmp.eq.s32.totalorder %s14, 0
      %p55 = por %p53, %p54
      %p56 = scmp.ne.s32.totalorder %s48, %s50
      %p57 = scmp.eq.s32.totalorder %s19, 1
      %p58 = por %p56, %p57
      %p59 = scmp.ne.s32.totalorder %s50, %s51
      %p60 = scmp.eq.s32.totalorder %s19, 0
      %p61 = por %p59, %p60
      %p62 = scmp.ne.s32.totalorder %s50, %s51
      %p63 = scmp.eq.s32.totalorder %s20, 1
      %p64 = por %p62, %p63
      %p66 = scmp.ne.s32.totalorder %s51, %s65
      %p67 = scmp.eq.s32.totalorder %s20, 0
      %p68 = por %p66, %p67
      %s69 = ssub.s32 %s14, %s21
      %p70 = scmp.eq.s32.totalorder %s69, 0
      %s72 = sadd.s32 %s71, 1
      %s73 = scalar_select %p70, %s71, %s72
      %p76 = pneg %p70
      %p77 = scmp.eq.s32.totalorder %s14, 1
      %p78 = por %p76, %p77
      %p79 = scmp.ne.s32.totalorder %s71, %s74
      %p80 = scmp.eq.s32.totalorder %s14, 0
      %p81 = por %p79, %p80
      %p82 = scmp.ne.s32.totalorder %s71, %s74
      %p83 = scmp.eq.s32.totalorder %s19, 1
      %p84 = por %p82, %p83
      %p85 = scmp.ne.s32.totalorder %s74, %s75
      %p86 = scmp.eq.s32.totalorder %s19, 0
      %p87 = por %p85, %p86
      %p88 = scmp.ne.s32.totalorder %s74, %s75
      %p89 = scmp.eq.s32.totalorder %s20, 1
      %p90 = por %p88, %p89
      %p92 = scmp.ne.s32.totalorder %s75, %s91
      %p93 = scmp.eq.s32.totalorder %s20, 0
      %p94 = por %p92, %p93
      %p95 = scmp.le.s32.totalorder 1, %s14
      %p96 = scmp.lt.s32.totalorder %s14, 3
      %p97 = pnand %p95, %p96
      %p98 = pneg %p97
      // Predicated region
      $region9: #{tpu_custom_call.1} parent=5 // pred_check
        _
      $region10: #{tpu_custom_call.1} parent=5 // pred_check_branch
        %100 = sbr.rel (%p97) target = $region12
      $region11: #{tpu_custom_call.1} parent=5 // pred_region
        %s101 = ssub.s32 %s14, 1
        // Predicated region
        $region13: #{tpu_custom_call.1} parent=11 // pred_check
          %p102 = pneg %p61
        $region14: #{tpu_custom_call.1} parent=11 // pred_check_branch
          %104 = sbr.rel (%p102) target = $region16
        $region15: #{tpu_custom_call.1} parent=11 // pred_region
          _
        $region16: #{tpu_custom_call.1} parent=11 // pred_fallthru
          _
      $region12: #{tpu_custom_call.1} parent=5 // pred_fallthru
        _
      %p105 = scmp.lt.s32.totalorder %s14, 2
      // Predicated region
      $region17: #{tpu_custom_call.1} parent=5 // pred_check
        %p106 = pneg %p105
      $region18: #{tpu_custom_call.1} parent=5 // pred_check_branch
        %108 = sbr.rel (%p106) target = $region20
      $region19: #{tpu_custom_call.1} parent=5 // pred_region
        // Predicated region
        $region21: #{tpu_custom_call.1} parent=19 // pred_check
          %p109 = pneg %p34
        $region22: #{tpu_custom_call.1} parent=19 // pred_check_branch
          %111 = sbr.rel (%p109) target = $region24
        $region23: #{tpu_custom_call.1} parent=19 // pred_region
          %s112 = sand.u32 %s24, 1
          %s113 = scalar_lea.sflag [#allocation3], %s112
          %s114 = sand.u32 %s24, 1
          %s115 = smul.addr %s114, 2
          %s116 = scalar_lea.vmem [#allocation2], %s115
          %s118 = ssub.s32 32, 32
          %119 = vsyncadd %s113, %s118
          %s120 = smul.addr %s14, 32
          %s121 = scalar_lea.hbm %s0, %s120
          %s123 = sshll.u32 %s116, 4
          %s124 = int_to_ptr.vmem [resolvable:$true] %s123
          %126 = dma.hbm_to_vmem [thread:$0]  %s121, 32, %s124, %s113
        $region24: #{tpu_custom_call.1} parent=19 // pred_fallthru
          _
      $region20: #{tpu_custom_call.1} parent=5 // pred_fallthru
        _
      %p127 = scmp.le.s32.totalorder 1, %s14
      %p128 = scmp.lt.s32.totalorder %s14, 3
      %p129 = pnand %p127, %p128
      %p130 = pneg %p129
      // Predicated region
      $region25: #{tpu_custom_call.1} parent=5 // pred_check
        _
      $region26: #{tpu_custom_call.1} parent=5 // pred_check_branch
        %132 = sbr.rel (%p129) target = $region28
      $region27: #{tpu_custom_call.1} parent=5 // pred_region
        %s133 = ssub.s32 %s14, 1
        %s134 = sand.u32 %s27, 1
        %s135 = scalar_lea.sflag [#allocation3], %s134
        %s136 = sand.u32 %s27, 1
        %s137 = smul.addr %s136, 2
        %s138 = scalar_lea.vmem [#allocation2], %s137
        // Predicated region
        $region29: #{tpu_custom_call.1} parent=27 // pred_check
          %p139 = pneg %p40
        $region30: #{tpu_custom_call.1} parent=27 // pred_check_branch
          %141 = sbr.rel (%p139) target = $region32
        $region31: #{tpu_custom_call.1} parent=27 // pred_region
          %142 = dma.done %s135, 32
        $region32: #{tpu_custom_call.1} parent=27 // pred_fallthru
          _
        %s143 = sand.u32 %s27, 1
        %s144 = scalar_lea.sflag [#allocation3], %s143
        %s145 = sand.u32 %s27, 1
        %s146 = smul.addr %s145, 2
        %s147 = scalar_lea.vmem [#allocation2], %s146
        %p148 = pneg %p40
        %p149 = pneg %p37
        %p150 = pneg %p61
        %p151 = pneg %p58
        %p152 = pneg %p87
        %p153 = pneg %p84
        %s154 = sand.u32 %s74, 1
        %s155 = scalar_lea.sflag [#allocation4], %s154
        %s156 = sand.u32 %s74, 1
        %s157 = smul.addr %s156, 2
        %s158 = scalar_lea.vmem [#allocation5], %s157
        %v159 = vld [vmem:[%s138] sm:$0x3]
        %v160 = vmul.f32 %v159, %v159
        %vm161 = vcmask 1041408
        %v162 = vsel %vm161, %v160, 0.0
        %163 = vadd.xlane.f32.xlu0 %v162
        %v164 = vpop.xlane.xlu0 %163
        %v165 = vrot.slane %v164, 4
        %v166 = vadd.f32 %v164, %v165
        %v167 = vrot.slane %v166, 2
        %v168 = vadd.f32 %v166, %v167
        %v169 = vrot.slane %v168, 1
        %v170 = vadd.f32 %v168, %v169
        %v171 = vmul.f32 %v170, 0.00390625
        %v172 = vrsqrt.pop %v171
        %v173 = vld [vmem:[%s1] sm:$0x3]
        %v174 = vmul.f32 %v159, %v172
        %v175 = vmul.f32 %v174, %v173
        %176 = vst [vmem:[%s158] sm:$0x3] %v175
        %s177 = sand.u32 %s74, 1
        %s178 = scalar_lea.sflag [#allocation4], %s177
        %s179 = sand.u32 %s74, 1
        %s180 = smul.addr %s179, 2
        %s181 = scalar_lea.vmem [#allocation5], %s180
        // Predicated region
        $region33: #{tpu_custom_call.1} parent=27 // pred_check
          %p182 = pneg %p84
        $region34: #{tpu_custom_call.1} parent=27 // pred_check_branch
          %184 = sbr.rel (%p182) target = $region36
        $region35: #{tpu_custom_call.1} parent=27 // pred_region
          %s186 = ssub.s32 32, 32
          %187 = vsyncadd %s178, %s186
          %s188 = smul.addr %s19, 32
          %s189 = scalar_lea.hbm %s2, %s188
          %s191 = sshll.u32 %s181, 4
          %s192 = int_to_ptr.vmem [resolvable:$true] %s191
          %194 = dma.vmem_to_hbm [thread:$0]  %s192, 32, %s189, %s178
        $region36: #{tpu_custom_call.1} parent=27 // pred_fallthru
          _
      $region28: #{tpu_custom_call.1} parent=5 // pred_fallthru
        _
      %p195 = scmp.le.s32.totalorder 2, %s14
      // Predicated region
      $region37: #{tpu_custom_call.1} parent=5 // pred_check
        %p196 = pneg %p195
      $region38: #{tpu_custom_call.1} parent=5 // pred_check_branch
        %198 = sbr.rel (%p196) target = $region40
      $region39: #{tpu_custom_call.1} parent=5 // pred_region
        %s199 = ssub.s32 %s14, 2
        // Predicated region
        $region41: #{tpu_custom_call.1} parent=39 // pred_check
          %p200 = pneg %p90
        $region42: #{tpu_custom_call.1} parent=39 // pred_check_branch
          %202 = sbr.rel (%p200) target = $region44
        $region43: #{tpu_custom_call.1} parent=39 // pred_region
          %s203 = sand.u32 %s75, 1
          %s204 = scalar_lea.sflag [#allocation4], %s203
          %s205 = sand.u32 %s75, 1
          %s206 = smul.addr %s205, 2
          %s207 = scalar_lea.vmem [#allocation5], %s206
          %208 = dma.done %s204, 32
        $region44: #{tpu_custom_call.1} parent=39 // pred_fallthru
          _
      $region40: #{tpu_custom_call.1} parent=5 // pred_fallthru
        _
    $region6: #{tpu_custom_call.1} parent=1 // loop_footer
      %s18 = sadd.s32 1, %s14
    $region7: #{tpu_custom_call.1} parent=1 // loop_footer_branch
      %13 = sbr.rel target = $region3
    $region8: #{tpu_custom_call.1} parent=1 // loop_exit
      _
    %209 = vsyncpa [#allocation3], 1
    %s210 = scalar_lea.sflag [#allocation3], 1
    %211 = vsyncpa %s210, 1
    %212 = vsyncpa [#allocation4], 1
    %s213 = scalar_lea.sflag [#allocation4], 1
    %214 = vsyncpa %s213, 1

</llo_original>
